<compile_context>
chip_gen: v7x
topology: tpu7x:2x2x1
jax: 0.10.0
libtpu: 0.0.40
codegen_flags: <defaults>
</compile_context>

<pallas_src>
import jax
import jax.numpy as jnp
from jax import lax
from jax.experimental import pallas as pl
from jax.experimental.pallas import tpu as pltpu


def lstm_kernel(x_ref, wih_ref, whh_ref, bias_ref, wfc_ref, bfc_ref, out_ref):
    # x_ref   : (T, Bp, 1)  input sequence (batch padded to 8 sublanes)
    # wih_ref : (1, 4H)     input->gate row (i/f/o rows pre-scaled by 0.5)
    # whh_ref : (H, 4H)     recurrent weights, pre-transposed & pre-scaled
    # bias_ref: (1, 4H)     b_ih + b_hh, pre-scaled
    # wfc_ref : (1, H)      fc weight row
    # bfc_ref : (1,)        fc bias (SMEM scalar)
    # out_ref : (Bp, 1)
    T = x_ref.shape[0]
    Bp = x_ref.shape[1]
    H = whh_ref.shape[0]

    # Hoist the tiny broadcast operands out of the unrolled loop.
    wih = wih_ref[...]     # (1, 4H)
    bias = bias_ref[...]   # (1, 4H)

    def step(t, carry):
        h, c = carry
        x_t = x_ref[t]                                            # (Bp, 1)
        # One recurrent matmul per step; rank-1 input projection + bias on the
        # (otherwise idle) VPU, hidden under MXU fill/drain latency.
        gates = (jnp.dot(h, whh_ref[...], preferred_element_type=jnp.float32)
                 + x_t * wih + bias)                              # (Bp, 4H)
        # Single tanh over all 4 gates; i/f/o were pre-scaled by 0.5 in the
        # weights so sigmoid(z) = 0.5*tanh(z/2) + 0.5 exactly.
        tg = jnp.tanh(gates)
        i = 0.5 * tg[:, 0 * H:1 * H] + 0.5
        f = 0.5 * tg[:, 1 * H:2 * H] + 0.5
        g = tg[:, 2 * H:3 * H]
        o = 0.5 * tg[:, 3 * H:4 * H] + 0.5
        c_new = f * c + i * g
        h_new = o * jnp.tanh(c_new)
        return h_new, c_new

    h0 = jnp.zeros((Bp, H), jnp.float32)
    c0 = jnp.zeros((Bp, H), jnp.float32)
    _, c_fin = lax.fori_loop(0, T, step, (h0, c0), unroll=True)

    # fc applied to the final CELL state c_n (see semantics note above).
    # VPU multiply + lane reduction; fc bias comes from SMEM as a scalar.
    out_ref[...] = (jnp.sum(c_fin * wfc_ref[...], axis=-1, keepdims=True)
                    + bfc_ref[0])


def prepare_lstm_params(w_ih, w_hh, b_ih, b_hh, w_fc, b_fc):
    """One-time weight preprocessing (kept OUT of the per-call forward).

    PyTorch shapes: w_ih (4H, I=1), w_hh (4H, H), b_ih/b_hh (4H,),
    w_fc (1, H), b_fc (1,).  Gate order along the 4H axis is [i, f, g, o].
    """
    H = w_hh.shape[1]
    f32 = jnp.float32
    # Pre-scale the sigmoid gates (i, f, o) by 0.5 so the kernel can use a
    # single tanh for all four gates: sigmoid(z) = 0.5 * tanh(0.5 * z) + 0.5.
    scale = jnp.concatenate([
        jnp.full((H,), 0.5, f32),   # i
        jnp.full((H,), 0.5, f32),   # f
        jnp.ones((H,), f32),        # g (tanh gate, unscaled)
        jnp.full((H,), 0.5, f32),   # o
    ])
    wih_row = (w_ih.astype(f32).reshape(-1) * scale).reshape(1, 4 * H)  # (1, 4H)
    whh_t = w_hh.astype(f32).T * scale[None, :]                         # (H, 4H)
    bias_row = ((b_ih + b_hh).astype(f32) * scale).reshape(1, 4 * H)    # (1, 4H)
    wfc_row = w_fc.astype(f32).reshape(1, H)                            # (1, H)
    bfc = b_fc.astype(f32).reshape(1,)                                  # (1,)  SMEM
    return wih_row, whh_t, bias_row, wfc_row, bfc


@jax.jit
def lstm_model_forward(x, params):
    """x: (B, T, 1) float (batch_first, like PyTorch).  Returns (1, B, 1)."""
    wih_row, whh_t, bias_row, wfc_row, bfc = params
    B, T, _ = x.shape
    H = whh_t.shape[0]
    Bp = max(8, ((B + 7) // 8) * 8)          # pad batch to the 8-sublane tile

    # Tiny (T, B, 1) transpose + zero-pad of the batch; fuses under jit.
    x_tb = jnp.transpose(x.astype(jnp.float32), (1, 0, 2))      # (T, B, 1)
    x_tb = jnp.pad(x_tb, ((0, 0), (0, Bp - B), (0, 0)))         # (T, Bp, 1)

    out = pl.pallas_call(
        lstm_kernel,
        out_shape=jax.ShapeDtypeStruct((Bp, 1), jnp.float32),
        in_specs=[
            pl.BlockSpec(memory_space=pltpu.MemorySpace.VMEM),   # x (T, Bp, 1)
            pl.BlockSpec(memory_space=pltpu.MemorySpace.VMEM),   # w_ih row (1, 4H)
            pl.BlockSpec(memory_space=pltpu.MemorySpace.VMEM),   # w_hh^T   (H, 4H)
            pl.BlockSpec(memory_space=pltpu.MemorySpace.VMEM),   # bias     (1, 4H)
            pl.BlockSpec(memory_space=pltpu.MemorySpace.VMEM),   # fc weight (1, H)
            pl.BlockSpec(memory_space=pltpu.MemorySpace.SMEM),   # fc bias  (1,)
        ],
        out_specs=pl.BlockSpec(memory_space=pltpu.MemorySpace.VMEM),
    )(x_tb, wih_row, whh_t, bias_row, wfc_row, bfc)

    # Drop padded batch rows; match PyTorch fc(c_n) -> (1, B, 1).
    return out[:B].reshape(1, B, 1)


def _reference_forward(x_btI, w_ih, w_hh, b_ih, b_hh, w_fc, b_fc):
    """Pure-JAX reference replicating torch.nn.LSTM + Linear semantics."""
    B, T, _ = x_btI.shape
    H = w_hh.shape[1]
    h = jnp.zeros((B, H), jnp.float32)
    c = jnp.zeros((B, H), jnp.float32)
    for t in range(T):
        x_t = x_btI[:, t, :]
        gates = x_t @ w_ih.T + h @ w_hh.T + b_ih + b_hh
        i = jax.nn.sigmoid(gates[:, 0 * H:1 * H])
        f = jax.nn.sigmoid(gates[:, 1 * H:2 * H])
        g = jnp.tanh(gates[:, 2 * H:3 * H])
        o = jax.nn.sigmoid(gates[:, 3 * H:4 * H])
        c = f * c + i * g
        h = o * jnp.tanh(c)
    c_n = c.reshape(1, B, H)       # h[-1] in the PyTorch module is c_n
    return c_n @ w_fc.T + b_fc


if __name__ == "__main__":
    hidden_size = 64
    input_size = 1
    output_size = 1
    B, T = 2, 8

    key = jax.random.PRNGKey(0)
    k_x, k1, k2, k3, k4, k5, k6 = jax.random.split(key, 7)

    # Deterministic parameter init (PyTorch-style uniform(-1/sqrt(H), 1/sqrt(H))).
    s = 1.0 / jnp.sqrt(jnp.float32(hidden_size))
    w_ih = jax.random.uniform(k1, (4 * hidden_size, input_size), jnp.float32, -s, s)
    w_hh = jax.random.uniform(k2, (4 * hidden_size, hidden_size), jnp.float32, -s, s)
    b_ih = jax.random.uniform(k3, (4 * hidden_size,), jnp.float32, -s, s)
    b_hh = jax.random.uniform(k4, (4 * hidden_size,), jnp.float32, -s, s)
    w_fc = jax.random.uniform(k5, (output_size, hidden_size), jnp.float32, -s, s)
    b_fc = jax.random.uniform(k6, (output_size,), jnp.float32, -s, s)

    x = jax.random.normal(k_x, (B, T, input_size), jnp.float32)

    # One-time weight prep (hoisted out of the forward path).
    params = prepare_lstm_params(w_ih, w_hh, b_ih, b_hh, w_fc, b_fc)
    params = jax.tree_util.tree_map(jax.block_until_ready, params)

    out = lstm_model_forward(x, params)
    out = jax.block_until_ready(out)

    ref = _reference_forward(x, w_ih, w_hh, b_ih, b_hh, w_fc, b_fc)
    assert out.shape == (1, B, 1), out.shape
    assert jnp.allclose(out, ref, atol=1e-4, rtol=1e-4), (out, ref)

    print("KERNEL_OK")
</pallas_src>

<mosaic_0001>
module attributes {stable_mosaic.version = 11 : i64} {
  func.func @lstm_kernel(%arg0: memref<8x8x1xf32, #tpu.memory_space<vmem>>, %arg1: memref<1x256xf32, #tpu.memory_space<vmem>>, %arg2: memref<64x256xf32, #tpu.memory_space<vmem>>, %arg3: memref<1x256xf32, #tpu.memory_space<vmem>>, %arg4: memref<1x64xf32, #tpu.memory_space<vmem>>, %arg5: memref<1xf32, #tpu.memory_space<smem>>, %arg6: memref<8x1xf32, #tpu.memory_space<vmem>>) attributes {dimension_semantics = [], scalar_prefetch = 0 : i64, scratch_operands = 0 : i64, tpu.core_type = #tpu.core_type<tc>} {
    %c0 = arith.constant 0 : index
    %c0_0 = arith.constant 0 : index
    %0 = vector.load %arg1[%c0, %c0_0] : memref<1x256xf32, #tpu.memory_space<vmem>>, vector<1x256xf32>
    %c0_1 = arith.constant 0 : index
    %c0_2 = arith.constant 0 : index
    %1 = vector.load %arg3[%c0_1, %c0_2] : memref<1x256xf32, #tpu.memory_space<vmem>>, vector<1x256xf32>
    %cst = arith.constant 0.000000e+00 : f32
    %2 = vector.broadcast %cst : f32 to vector<8x64xf32>
    %cst_3 = arith.constant 0.000000e+00 : f32
    %3 = vector.broadcast %cst_3 : f32 to vector<8x64xf32>
    %c0_i32 = arith.constant 0 : i32
    %4 = arith.index_cast %c0_i32 : i32 to index
    %c0_4 = arith.constant 0 : index
    %c0_5 = arith.constant 0 : index
    %5 = vector.load %arg0[%4, %c0_4, %c0_5] : memref<8x8x1xf32, #tpu.memory_space<vmem>>, vector<1x8x1xf32>
    %6 = vector.shape_cast %5 : vector<1x8x1xf32> to vector<8x1xf32>
    %c0_6 = arith.constant 0 : index
    %c0_7 = arith.constant 0 : index
    %7 = vector.load %arg2[%c0_6, %c0_7] : memref<64x256xf32, #tpu.memory_space<vmem>>, vector<64x256xf32>
    %cst_8 = arith.constant dense<0.000000e+00> : vector<8x256xf32>
    %8 = tpu.matmul %2, %7, %cst_8 {dimension_numbers = #tpu.dot_dimension_numbers<[1], [0], [0], [1], [0, 0, 1, 1], [], []>} : vector<8x64xf32>, vector<64x256xf32>, vector<8x256xf32> -> vector<8x256xf32>
    %9 = vector.broadcast %6 : vector<8x1xf32> to vector<8x256xf32>
    %10 = vector.broadcast %0 : vector<1x256xf32> to vector<8x256xf32>
    %11 = arith.mulf %9, %10 : vector<8x256xf32>
    %12 = arith.addf %8, %11 : vector<8x256xf32>
    %13 = vector.broadcast %1 : vector<1x256xf32> to vector<8x256xf32>
    %14 = arith.addf %12, %13 : vector<8x256xf32>
    %15 = math.tanh %14 : vector<8x256xf32>
    %16 = vector.extract_strided_slice %15 {offsets = [0, 0], sizes = [8, 64], strides = [1, 1]} : vector<8x256xf32> to vector<8x64xf32>
    %cst_9 = arith.constant 5.000000e-01 : f32
    %17 = vector.broadcast %cst_9 : f32 to vector<8x64xf32>
    %18 = arith.mulf %17, %16 : vector<8x64xf32>
    %cst_10 = arith.constant 5.000000e-01 : f32
    %19 = vector.broadcast %cst_10 : f32 to vector<8x64xf32>
    %20 = arith.addf %18, %19 : vector<8x64xf32>
    %21 = vector.extract_strided_slice %15 {offsets = [0, 64], sizes = [8, 64], strides = [1, 1]} : vector<8x256xf32> to vector<8x64xf32>
    %cst_11 = arith.constant 5.000000e-01 : f32
    %22 = vector.broadcast %cst_11 : f32 to vector<8x64xf32>
    %23 = arith.mulf %22, %21 : vector<8x64xf32>
    %cst_12 = arith.constant 5.000000e-01 : f32
    %24 = vector.broadcast %cst_12 : f32 to vector<8x64xf32>
    %25 = arith.addf %23, %24 : vector<8x64xf32>
    %26 = vector.extract_strided_slice %15 {offsets = [0, 128], sizes = [8, 64], strides = [1, 1]} : vector<8x256xf32> to vector<8x64xf32>
    %27 = vector.extract_strided_slice %15 {offsets = [0, 192], sizes = [8, 64], strides = [1, 1]} : vector<8x256xf32> to vector<8x64xf32>
    %cst_13 = arith.constant 5.000000e-01 : f32
    %28 = vector.broadcast %cst_13 : f32 to vector<8x64xf32>
    %29 = arith.mulf %28, %27 : vector<8x64xf32>
    %cst_14 = arith.constant 5.000000e-01 : f32
    %30 = vector.broadcast %cst_14 : f32 to vector<8x64xf32>
    %31 = arith.addf %29, %30 : vector<8x64xf32>
    %32 = arith.mulf %25, %3 : vector<8x64xf32>
    %33 = arith.mulf %20, %26 : vector<8x64xf32>
    %34 = arith.addf %32, %33 : vector<8x64xf32>
    %35 = math.tanh %34 : vector<8x64xf32>
    %36 = arith.mulf %31, %35 : vector<8x64xf32>
    %c1_i32 = arith.constant 1 : i32
    %37 = arith.index_cast %c1_i32 : i32 to index
    %c0_15 = arith.constant 0 : index
    %c0_16 = arith.constant 0 : index
    %38 = vector.load %arg0[%37, %c0_15, %c0_16] : memref<8x8x1xf32, #tpu.memory_space<vmem>>, vector<1x8x1xf32>
    %39 = vector.shape_cast %38 : vector<1x8x1xf32> to vector<8x1xf32>
    %c0_17 = arith.constant 0 : index
    %c0_18 = arith.constant 0 : index
    %40 = vector.load %arg2[%c0_17, %c0_18] : memref<64x256xf32, #tpu.memory_space<vmem>>, vector<64x256xf32>
    %cst_19 = arith.constant dense<0.000000e+00> : vector<8x256xf32>
    %41 = tpu.matmul %36, %40, %cst_19 {dimension_numbers = #tpu.dot_dimension_numbers<[1], [0], [0], [1], [0, 0, 1, 1], [], []>} : vector<8x64xf32>, vector<64x256xf32>, vector<8x256xf32> -> vector<8x256xf32>
    %42 = vector.broadcast %39 : vector<8x1xf32> to vector<8x256xf32>
    %43 = vector.broadcast %0 : vector<1x256xf32> to vector<8x256xf32>
    %44 = arith.mulf %42, %43 : vector<8x256xf32>
    %45 = arith.addf %41, %44 : vector<8x256xf32>
    %46 = vector.broadcast %1 : vector<1x256xf32> to vector<8x256xf32>
    %47 = arith.addf %45, %46 : vector<8x256xf32>
    %48 = math.tanh %47 : vector<8x256xf32>
    %49 = vector.extract_strided_slice %48 {offsets = [0, 0], sizes = [8, 64], strides = [1, 1]} : vector<8x256xf32> to vector<8x64xf32>
    %cst_20 = arith.constant 5.000000e-01 : f32
    %50 = vector.broadcast %cst_20 : f32 to vector<8x64xf32>
    %51 = arith.mulf %50, %49 : vector<8x64xf32>
    %cst_21 = arith.constant 5.000000e-01 : f32
    %52 = vector.broadcast %cst_21 : f32 to vector<8x64xf32>
    %53 = arith.addf %51, %52 : vector<8x64xf32>
    %54 = vector.extract_strided_slice %48 {offsets = [0, 64], sizes = [8, 64], strides = [1, 1]} : vector<8x256xf32> to vector<8x64xf32>
    %cst_22 = arith.constant 5.000000e-01 : f32
    %55 = vector.broadcast %cst_22 : f32 to vector<8x64xf32>
    %56 = arith.mulf %55, %54 : vector<8x64xf32>
    %cst_23 = arith.constant 5.000000e-01 : f32
    %57 = vector.broadcast %cst_23 : f32 to vector<8x64xf32>
    %58 = arith.addf %56, %57 : vector<8x64xf32>
    %59 = vector.extract_strided_slice %48 {offsets = [0, 128], sizes = [8, 64], strides = [1, 1]} : vector<8x256xf32> to vector<8x64xf32>
    %60 = vector.extract_strided_slice %48 {offsets = [0, 192], sizes = [8, 64], strides = [1, 1]} : vector<8x256xf32> to vector<8x64xf32>
    %cst_24 = arith.constant 5.000000e-01 : f32
    %61 = vector.broadcast %cst_24 : f32 to vector<8x64xf32>
    %62 = arith.mulf %61, %60 : vector<8x64xf32>
    %cst_25 = arith.constant 5.000000e-01 : f32
    %63 = vector.broadcast %cst_25 : f32 to vector<8x64xf32>
    %64 = arith.addf %62, %63 : vector<8x64xf32>
    %65 = arith.mulf %58, %34 : vector<8x64xf32>
    %66 = arith.mulf %53, %59 : vector<8x64xf32>
    %67 = arith.addf %65, %66 : vector<8x64xf32>
    %68 = math.tanh %67 : vector<8x64xf32>
    %69 = arith.mulf %64, %68 : vector<8x64xf32>
    %c2_i32 = arith.constant 2 : i32
    %70 = arith.index_cast %c2_i32 : i32 to index
    %c0_26 = arith.constant 0 : index
    %c0_27 = arith.constant 0 : index
    %71 = vector.load %arg0[%70, %c0_26, %c0_27] : memref<8x8x1xf32, #tpu.memory_space<vmem>>, vector<1x8x1xf32>
    %72 = vector.shape_cast %71 : vector<1x8x1xf32> to vector<8x1xf32>
    %c0_28 = arith.constant 0 : index
    %c0_29 = arith.constant 0 : index
    %73 = vector.load %arg2[%c0_28, %c0_29] : memref<64x256xf32, #tpu.memory_space<vmem>>, vector<64x256xf32>
    %cst_30 = arith.constant dense<0.000000e+00> : vector<8x256xf32>
    %74 = tpu.matmul %69, %73, %cst_30 {dimension_numbers = #tpu.dot_dimension_numbers<[1], [0], [0], [1], [0, 0, 1, 1], [], []>} : vector<8x64xf32>, vector<64x256xf32>, vector<8x256xf32> -> vector<8x256xf32>
    %75 = vector.broadcast %72 : vector<8x1xf32> to vector<8x256xf32>
    %76 = vector.broadcast %0 : vector<1x256xf32> to vector<8x256xf32>
    %77 = arith.mulf %75, %76 : vector<8x256xf32>
    %78 = arith.addf %74, %77 : vector<8x256xf32>
    %79 = vector.broadcast %1 : vector<1x256xf32> to vector<8x256xf32>
    %80 = arith.addf %78, %79 : vector<8x256xf32>
    %81 = math.tanh %80 : vector<8x256xf32>
    %82 = vector.extract_strided_slice %81 {offsets = [0, 0], sizes = [8, 64], strides = [1, 1]} : vector<8x256xf32> to vector<8x64xf32>
    %cst_31 = arith.constant 5.000000e-01 : f32
    %83 = vector.broadcast %cst_31 : f32 to vector<8x64xf32>
    %84 = arith.mulf %83, %82 : vector<8x64xf32>
    %cst_32 = arith.constant 5.000000e-01 : f32
    %85 = vector.broadcast %cst_32 : f32 to vector<8x64xf32>
    %86 = arith.addf %84, %85 : vector<8x64xf32>
    %87 = vector.extract_strided_slice %81 {offsets = [0, 64], sizes = [8, 64], strides = [1, 1]} : vector<8x256xf32> to vector<8x64xf32>
    %cst_33 = arith.constant 5.000000e-01 : f32
    %88 = vector.broadcast %cst_33 : f32 to vector<8x64xf32>
    %89 = arith.mulf %88, %87 : vector<8x64xf32>
    %cst_34 = arith.constant 5.000000e-01 : f32
    %90 = vector.broadcast %cst_34 : f32 to vector<8x64xf32>
    %91 = arith.addf %89, %90 : vector<8x64xf32>
    %92 = vector.extract_strided_slice %81 {offsets = [0, 128], sizes = [8, 64], strides = [1, 1]} : vector<8x256xf32> to vector<8x64xf32>
    %93 = vector.extract_strided_slice %81 {offsets = [0, 192], sizes = [8, 64], strides = [1, 1]} : vector<8x256xf32> to vector<8x64xf32>
    %cst_35 = arith.constant 5.000000e-01 : f32
    %94 = vector.broadcast %cst_35 : f32 to vector<8x64xf32>
    %95 = arith.mulf %94, %93 : vector<8x64xf32>
    %cst_36 = arith.constant 5.000000e-01 : f32
    %96 = vector.broadcast %cst_36 : f32 to vector<8x64xf32>
    %97 = arith.addf %95, %96 : vector<8x64xf32>
    %98 = arith.mulf %91, %67 : vector<8x64xf32>
    %99 = arith.mulf %86, %92 : vector<8x64xf32>
    %100 = arith.addf %98, %99 : vector<8x64xf32>
    %101 = math.tanh %100 : vector<8x64xf32>
    %102 = arith.mulf %97, %101 : vector<8x64xf32>
    %c3_i32 = arith.constant 3 : i32
    %103 = arith.index_cast %c3_i32 : i32 to index
    %c0_37 = arith.constant 0 : index
    %c0_38 = arith.constant 0 : index
    %104 = vector.load %arg0[%103, %c0_37, %c0_38] : memref<8x8x1xf32, #tpu.memory_space<vmem>>, vector<1x8x1xf32>
    %105 = vector.shape_cast %104 : vector<1x8x1xf32> to vector<8x1xf32>
    %c0_39 = arith.constant 0 : index
    %c0_40 = arith.constant 0 : index
    %106 = vector.load %arg2[%c0_39, %c0_40] : memref<64x256xf32, #tpu.memory_space<vmem>>, vector<64x256xf32>
    %cst_41 = arith.constant dense<0.000000e+00> : vector<8x256xf32>
    %107 = tpu.matmul %102, %106, %cst_41 {dimension_numbers = #tpu.dot_dimension_numbers<[1], [0], [0], [1], [0, 0, 1, 1], [], []>} : vector<8x64xf32>, vector<64x256xf32>, vector<8x256xf32> -> vector<8x256xf32>
    %108 = vector.broadcast %105 : vector<8x1xf32> to vector<8x256xf32>
    %109 = vector.broadcast %0 : vector<1x256xf32> to vector<8x256xf32>
    %110 = arith.mulf %108, %109 : vector<8x256xf32>
    %111 = arith.addf %107, %110 : vector<8x256xf32>
    %112 = vector.broadcast %1 : vector<1x256xf32> to vector<8x256xf32>
    %113 = arith.addf %111, %112 : vector<8x256xf32>
    %114 = math.tanh %113 : vector<8x256xf32>
    %115 = vector.extract_strided_slice %114 {offsets = [0, 0], sizes = [8, 64], strides = [1, 1]} : vector<8x256xf32> to vector<8x64xf32>
    %cst_42 = arith.constant 5.000000e-01 : f32
    %116 = vector.broadcast %cst_42 : f32 to vector<8x64xf32>
    %117 = arith.mulf %116, %115 : vector<8x64xf32>
    %cst_43 = arith.constant 5.000000e-01 : f32
    %118 = vector.broadcast %cst_43 : f32 to vector<8x64xf32>
    %119 = arith.addf %117, %118 : vector<8x64xf32>
    %120 = vector.extract_strided_slice %114 {offsets = [0, 64], sizes = [8, 64], strides = [1, 1]} : vector<8x256xf32> to vector<8x64xf32>
    %cst_44 = arith.constant 5.000000e-01 : f32
    %121 = vector.broadcast %cst_44 : f32 to vector<8x64xf32>
    %122 = arith.mulf %121, %120 : vector<8x64xf32>
    %cst_45 = arith.constant 5.000000e-01 : f32
    %123 = vector.broadcast %cst_45 : f32 to vector<8x64xf32>
    %124 = arith.addf %122, %123 : vector<8x64xf32>
    %125 = vector.extract_strided_slice %114 {offsets = [0, 128], sizes = [8, 64], strides = [1, 1]} : vector<8x256xf32> to vector<8x64xf32>
    %126 = vector.extract_strided_slice %114 {offsets = [0, 192], sizes = [8, 64], strides = [1, 1]} : vector<8x256xf32> to vector<8x64xf32>
    %cst_46 = arith.constant 5.000000e-01 : f32
    %127 = vector.broadcast %cst_46 : f32 to vector<8x64xf32>
    %128 = arith.mulf %127, %126 : vector<8x64xf32>
    %cst_47 = arith.constant 5.000000e-01 : f32
    %129 = vector.broadcast %cst_47 : f32 to vector<8x64xf32>
    %130 = arith.addf %128, %129 : vector<8x64xf32>
    %131 = arith.mulf %124, %100 : vector<8x64xf32>
    %132 = arith.mulf %119, %125 : vector<8x64xf32>
    %133 = arith.addf %131, %132 : vector<8x64xf32>
    %134 = math.tanh %133 : vector<8x64xf32>
    %135 = arith.mulf %130, %134 : vector<8x64xf32>
    %c4_i32 = arith.constant 4 : i32
    %136 = arith.index_cast %c4_i32 : i32 to index
    %c0_48 = arith.constant 0 : index
    %c0_49 = arith.constant 0 : index
    %137 = vector.load %arg0[%136, %c0_48, %c0_49] : memref<8x8x1xf32, #tpu.memory_space<vmem>>, vector<1x8x1xf32>
    %138 = vector.shape_cast %137 : vector<1x8x1xf32> to vector<8x1xf32>
    %c0_50 = arith.constant 0 : index
    %c0_51 = arith.constant 0 : index
    %139 = vector.load %arg2[%c0_50, %c0_51] : memref<64x256xf32, #tpu.memory_space<vmem>>, vector<64x256xf32>
    %cst_52 = arith.constant dense<0.000000e+00> : vector<8x256xf32>
    %140 = tpu.matmul %135, %139, %cst_52 {dimension_numbers = #tpu.dot_dimension_numbers<[1], [0], [0], [1], [0, 0, 1, 1], [], []>} : vector<8x64xf32>, vector<64x256xf32>, vector<8x256xf32> -> vector<8x256xf32>
    %141 = vector.broadcast %138 : vector<8x1xf32> to vector<8x256xf32>
    %142 = vector.broadcast %0 : vector<1x256xf32> to vector<8x256xf32>
    %143 = arith.mulf %141, %142 : vector<8x256xf32>
    %144 = arith.addf %140, %143 : vector<8x256xf32>
    %145 = vector.broadcast %1 : vector<1x256xf32> to vector<8x256xf32>
    %146 = arith.addf %144, %145 : vector<8x256xf32>
    %147 = math.tanh %146 : vector<8x256xf32>
    %148 = vector.extract_strided_slice %147 {offsets = [0, 0], sizes = [8, 64], strides = [1, 1]} : vector<8x256xf32> to vector<8x64xf32>
    %cst_53 = arith.constant 5.000000e-01 : f32
    %149 = vector.broadcast %cst_53 : f32 to vector<8x64xf32>
    %150 = arith.mulf %149, %148 : vector<8x64xf32>
    %cst_54 = arith.constant 5.000000e-01 : f32
    %151 = vector.broadcast %cst_54 : f32 to vector<8x64xf32>
    %152 = arith.addf %150, %151 : vector<8x64xf32>
    %153 = vector.extract_strided_slice %147 {offsets = [0, 64], sizes = [8, 64], strides = [1, 1]} : vector<8x256xf32> to vector<8x64xf32>
    %cst_55 = arith.constant 5.000000e-01 : f32
    %154 = vector.broadcast %cst_55 : f32 to vector<8x64xf32>
    %155 = arith.mulf %154, %153 : vector<8x64xf32>
    %cst_56 = arith.constant 5.000000e-01 : f32
    %156 = vector.broadcast %cst_56 : f32 to vector<8x64xf32>
    %157 = arith.addf %155, %156 : vector<8x64xf32>
    %158 = vector.extract_strided_slice %147 {offsets = [0, 128], sizes = [8, 64], strides = [1, 1]} : vector<8x256xf32> to vector<8x64xf32>
    %159 = vector.extract_strided_slice %147 {offsets = [0, 192], sizes = [8, 64], strides = [1, 1]} : vector<8x256xf32> to vector<8x64xf32>
    %cst_57 = arith.constant 5.000000e-01 : f32
    %160 = vector.broadcast %cst_57 : f32 to vector<8x64xf32>
    %161 = arith.mulf %160, %159 : vector<8x64xf32>
    %cst_58 = arith.constant 5.000000e-01 : f32
    %162 = vector.broadcast %cst_58 : f32 to vector<8x64xf32>
    %163 = arith.addf %161, %162 : vector<8x64xf32>
    %164 = arith.mulf %157, %133 : vector<8x64xf32>
    %165 = arith.mulf %152, %158 : vector<8x64xf32>
    %166 = arith.addf %164, %165 : vector<8x64xf32>
    %167 = math.tanh %166 : vector<8x64xf32>
    %168 = arith.mulf %163, %167 : vector<8x64xf32>
    %c5_i32 = arith.constant 5 : i32
    %169 = arith.index_cast %c5_i32 : i32 to index
    %c0_59 = arith.constant 0 : index
    %c0_60 = arith.constant 0 : index
    %170 = vector.load %arg0[%169, %c0_59, %c0_60] : memref<8x8x1xf32, #tpu.memory_space<vmem>>, vector<1x8x1xf32>
    %171 = vector.shape_cast %170 : vector<1x8x1xf32> to vector<8x1xf32>
    %c0_61 = arith.constant 0 : index
    %c0_62 = arith.constant 0 : index
    %172 = vector.load %arg2[%c0_61, %c0_62] : memref<64x256xf32, #tpu.memory_space<vmem>>, vector<64x256xf32>
    %cst_63 = arith.constant dense<0.000000e+00> : vector<8x256xf32>
    %173 = tpu.matmul %168, %172, %cst_63 {dimension_numbers = #tpu.dot_dimension_numbers<[1], [0], [0], [1], [0, 0, 1, 1], [], []>} : vector<8x64xf32>, vector<64x256xf32>, vector<8x256xf32> -> vector<8x256xf32>
    %174 = vector.broadcast %171 : vector<8x1xf32> to vector<8x256xf32>
    %175 = vector.broadcast %0 : vector<1x256xf32> to vector<8x256xf32>
    %176 = arith.mulf %174, %175 : vector<8x256xf32>
    %177 = arith.addf %173, %176 : vector<8x256xf32>
    %178 = vector.broadcast %1 : vector<1x256xf32> to vector<8x256xf32>
    %179 = arith.addf %177, %178 : vector<8x256xf32>
    %180 = math.tanh %179 : vector<8x256xf32>
    %181 = vector.extract_strided_slice %180 {offsets = [0, 0], sizes = [8, 64], strides = [1, 1]} : vector<8x256xf32> to vector<8x64xf32>
    %cst_64 = arith.constant 5.000000e-01 : f32
    %182 = vector.broadcast %cst_64 : f32 to vector<8x64xf32>
    %183 = arith.mulf %182, %181 : vector<8x64xf32>
    %cst_65 = arith.constant 5.000000e-01 : f32
    %184 = vector.broadcast %cst_65 : f32 to vector<8x64xf32>
    %185 = arith.addf %183, %184 : vector<8x64xf32>
    %186 = vector.extract_strided_slice %180 {offsets = [0, 64], sizes = [8, 64], strides = [1, 1]} : vector<8x256xf32> to vector<8x64xf32>
    %cst_66 = arith.constant 5.000000e-01 : f32
    %187 = vector.broadcast %cst_66 : f32 to vector<8x64xf32>
    %188 = arith.mulf %187, %186 : vector<8x64xf32>
    %cst_67 = arith.constant 5.000000e-01 : f32
    %189 = vector.broadcast %cst_67 : f32 to vector<8x64xf32>
    %190 = arith.addf %188, %189 : vector<8x64xf32>
    %191 = vector.extract_strided_slice %180 {offsets = [0, 128], sizes = [8, 64], strides = [1, 1]} : vector<8x256xf32> to vector<8x64xf32>
    %192 = vector.extract_strided_slice %180 {offsets = [0, 192], sizes = [8, 64], strides = [1, 1]} : vector<8x256xf32> to vector<8x64xf32>
    %cst_68 = arith.constant 5.000000e-01 : f32
    %193 = vector.broadcast %cst_68 : f32 to vector<8x64xf32>
    %194 = arith.mulf %193, %192 : vector<8x64xf32>
    %cst_69 = arith.constant 5.000000e-01 : f32
    %195 = vector.broadcast %cst_69 : f32 to vector<8x64xf32>
    %196 = arith.addf %194, %195 : vector<8x64xf32>
    %197 = arith.mulf %190, %166 : vector<8x64xf32>
    %198 = arith.mulf %185, %191 : vector<8x64xf32>
    %199 = arith.addf %197, %198 : vector<8x64xf32>
    %200 = math.tanh %199 : vector<8x64xf32>
    %201 = arith.mulf %196, %200 : vector<8x64xf32>
    %c6_i32 = arith.constant 6 : i32
    %202 = arith.index_cast %c6_i32 : i32 to index
    %c0_70 = arith.constant 0 : index
    %c0_71 = arith.constant 0 : index
    %203 = vector.load %arg0[%202, %c0_70, %c0_71] : memref<8x8x1xf32, #tpu.memory_space<vmem>>, vector<1x8x1xf32>
    %204 = vector.shape_cast %203 : vector<1x8x1xf32> to vector<8x1xf32>
    %c0_72 = arith.constant 0 : index
    %c0_73 = arith.constant 0 : index
    %205 = vector.load %arg2[%c0_72, %c0_73] : memref<64x256xf32, #tpu.memory_space<vmem>>, vector<64x256xf32>
    %cst_74 = arith.constant dense<0.000000e+00> : vector<8x256xf32>
    %206 = tpu.matmul %201, %205, %cst_74 {dimension_numbers = #tpu.dot_dimension_numbers<[1], [0], [0], [1], [0, 0, 1, 1], [], []>} : vector<8x64xf32>, vector<64x256xf32>, vector<8x256xf32> -> vector<8x256xf32>
    %207 = vector.broadcast %204 : vector<8x1xf32> to vector<8x256xf32>
    %208 = vector.broadcast %0 : vector<1x256xf32> to vector<8x256xf32>
    %209 = arith.mulf %207, %208 : vector<8x256xf32>
    %210 = arith.addf %206, %209 : vector<8x256xf32>
    %211 = vector.broadcast %1 : vector<1x256xf32> to vector<8x256xf32>
    %212 = arith.addf %210, %211 : vector<8x256xf32>
    %213 = math.tanh %212 : vector<8x256xf32>
    %214 = vector.extract_strided_slice %213 {offsets = [0, 0], sizes = [8, 64], strides = [1, 1]} : vector<8x256xf32> to vector<8x64xf32>
    %cst_75 = arith.constant 5.000000e-01 : f32
    %215 = vector.broadcast %cst_75 : f32 to vector<8x64xf32>
    %216 = arith.mulf %215, %214 : vector<8x64xf32>
    %cst_76 = arith.constant 5.000000e-01 : f32
    %217 = vector.broadcast %cst_76 : f32 to vector<8x64xf32>
    %218 = arith.addf %216, %217 : vector<8x64xf32>
    %219 = vector.extract_strided_slice %213 {offsets = [0, 64], sizes = [8, 64], strides = [1, 1]} : vector<8x256xf32> to vector<8x64xf32>
    %cst_77 = arith.constant 5.000000e-01 : f32
    %220 = vector.broadcast %cst_77 : f32 to vector<8x64xf32>
    %221 = arith.mulf %220, %219 : vector<8x64xf32>
    %cst_78 = arith.constant 5.000000e-01 : f32
    %222 = vector.broadcast %cst_78 : f32 to vector<8x64xf32>
    %223 = arith.addf %221, %222 : vector<8x64xf32>
    %224 = vector.extract_strided_slice %213 {offsets = [0, 128], sizes = [8, 64], strides = [1, 1]} : vector<8x256xf32> to vector<8x64xf32>
    %225 = vector.extract_strided_slice %213 {offsets = [0, 192], sizes = [8, 64], strides = [1, 1]} : vector<8x256xf32> to vector<8x64xf32>
    %cst_79 = arith.constant 5.000000e-01 : f32
    %226 = vector.broadcast %cst_79 : f32 to vector<8x64xf32>
    %227 = arith.mulf %226, %225 : vector<8x64xf32>
    %cst_80 = arith.constant 5.000000e-01 : f32
    %228 = vector.broadcast %cst_80 : f32 to vector<8x64xf32>
    %229 = arith.addf %227, %228 : vector<8x64xf32>
    %230 = arith.mulf %223, %199 : vector<8x64xf32>
    %231 = arith.mulf %218, %224 : vector<8x64xf32>
    %232 = arith.addf %230, %231 : vector<8x64xf32>
    %233 = math.tanh %232 : vector<8x64xf32>
    %234 = arith.mulf %229, %233 : vector<8x64xf32>
    %c7_i32 = arith.constant 7 : i32
    %235 = arith.index_cast %c7_i32 : i32 to index
    %c0_81 = arith.constant 0 : index
    %c0_82 = arith.constant 0 : index
    %236 = vector.load %arg0[%235, %c0_81, %c0_82] : memref<8x8x1xf32, #tpu.memory_space<vmem>>, vector<1x8x1xf32>
    %237 = vector.shape_cast %236 : vector<1x8x1xf32> to vector<8x1xf32>
    %c0_83 = arith.constant 0 : index
    %c0_84 = arith.constant 0 : index
    %238 = vector.load %arg2[%c0_83, %c0_84] : memref<64x256xf32, #tpu.memory_space<vmem>>, vector<64x256xf32>
    %cst_85 = arith.constant dense<0.000000e+00> : vector<8x256xf32>
    %239 = tpu.matmul %234, %238, %cst_85 {dimension_numbers = #tpu.dot_dimension_numbers<[1], [0], [0], [1], [0, 0, 1, 1], [], []>} : vector<8x64xf32>, vector<64x256xf32>, vector<8x256xf32> -> vector<8x256xf32>
    %240 = vector.broadcast %237 : vector<8x1xf32> to vector<8x256xf32>
    %241 = vector.broadcast %0 : vector<1x256xf32> to vector<8x256xf32>
    %242 = arith.mulf %240, %241 : vector<8x256xf32>
    %243 = arith.addf %239, %242 : vector<8x256xf32>
    %244 = vector.broadcast %1 : vector<1x256xf32> to vector<8x256xf32>
    %245 = arith.addf %243, %244 : vector<8x256xf32>
    %246 = math.tanh %245 : vector<8x256xf32>
    %247 = vector.extract_strided_slice %246 {offsets = [0, 0], sizes = [8, 64], strides = [1, 1]} : vector<8x256xf32> to vector<8x64xf32>
    %cst_86 = arith.constant 5.000000e-01 : f32
    %248 = vector.broadcast %cst_86 : f32 to vector<8x64xf32>
    %249 = arith.mulf %248, %247 : vector<8x64xf32>
    %cst_87 = arith.constant 5.000000e-01 : f32
    %250 = vector.broadcast %cst_87 : f32 to vector<8x64xf32>
    %251 = arith.addf %249, %250 : vector<8x64xf32>
    %252 = vector.extract_strided_slice %246 {offsets = [0, 64], sizes = [8, 64], strides = [1, 1]} : vector<8x256xf32> to vector<8x64xf32>
    %cst_88 = arith.constant 5.000000e-01 : f32
    %253 = vector.broadcast %cst_88 : f32 to vector<8x64xf32>
    %254 = arith.mulf %253, %252 : vector<8x64xf32>
    %cst_89 = arith.constant 5.000000e-01 : f32
    %255 = vector.broadcast %cst_89 : f32 to vector<8x64xf32>
    %256 = arith.addf %254, %255 : vector<8x64xf32>
    %257 = vector.extract_strided_slice %246 {offsets = [0, 128], sizes = [8, 64], strides = [1, 1]} : vector<8x256xf32> to vector<8x64xf32>
    %258 = vector.extract_strided_slice %246 {offsets = [0, 192], sizes = [8, 64], strides = [1, 1]} : vector<8x256xf32> to vector<8x64xf32>
    %cst_90 = arith.constant 5.000000e-01 : f32
    %259 = vector.broadcast %cst_90 : f32 to vector<8x64xf32>
    %260 = arith.mulf %259, %258 : vector<8x64xf32>
    %cst_91 = arith.constant 5.000000e-01 : f32
    %261 = vector.broadcast %cst_91 : f32 to vector<8x64xf32>
    %262 = arith.addf %260, %261 : vector<8x64xf32>
    %263 = arith.mulf %256, %232 : vector<8x64xf32>
    %264 = arith.mulf %251, %257 : vector<8x64xf32>
    %265 = arith.addf %263, %264 : vector<8x64xf32>
    %266 = math.tanh %265 : vector<8x64xf32>
    %267 = arith.mulf %262, %266 : vector<8x64xf32>
    %c8_i32 = arith.constant 8 : i32
    %c0_92 = arith.constant 0 : index
    %c0_93 = arith.constant 0 : index
    %268 = vector.load %arg4[%c0_92, %c0_93] : memref<1x64xf32, #tpu.memory_space<vmem>>, vector<1x64xf32>
    %269 = vector.broadcast %268 : vector<1x64xf32> to vector<8x64xf32>
    %270 = arith.mulf %265, %269 : vector<8x64xf32>
    %cst_94 = arith.constant dense<0.000000e+00> : vector<8xf32>
    %271 = vector.multi_reduction <add>, %270, %cst_94 [1] : vector<8x64xf32> to vector<8xf32>
    %272 = vector.shape_cast %271 : vector<8xf32> to vector<8x1xf32>
    %c0_95 = arith.constant 0 : index
    %273 = memref.load %arg5[%c0_95] : memref<1xf32, #tpu.memory_space<smem>>
    %274 = vector.broadcast %273 : f32 to vector<8x1xf32>
    %275 = arith.addf %272, %274 : vector<8x1xf32>
    %c0_96 = arith.constant 0 : index
    %c0_97 = arith.constant 0 : index
    %276 = vector.load %arg6[%c0_96, %c0_97] : memref<8x1xf32, #tpu.memory_space<vmem>>, vector<8x1xf32>
    tpu.vector_store %arg6[%c0_96, %c0_97], %275 {strides = array<i32>} : memref<8x1xf32, #tpu.memory_space<vmem>>, vector<8x1xf32>,
    return
  }
}

</mosaic_0001>

<llo_original>
// kernel: lstm_model_forward.1
$region0: #{lstm_model_forward.1}
  #allocation0 [shape = 'u32[]', space=smem, size = 0x4, offset = 0x4, fixed_abs, tag = 'smem constant byte address 0x4 - core index']
  #allocation1 [shape = 'u32[144,128]{1,0:T(1,128)}', space=vmem, size = 0x12000, scoped, tag = 'internal scratch']
  #allocation2 [shape = 'f32[1]{0:T(128)S(6)}', space=smem, size = 0x200, scoped, tag = 'scoped memory for lstm_model_forward.1']
  %s0 = inlined_call_operand.vmem [shape: f32[8,8,1], index: 0, kind: input, shape index: {}]
  %s1 = inlined_call_operand.vmem [shape: f32[1,256], index: 1, kind: input, shape index: {}]
  %s2 = inlined_call_operand.hbm [shape: f32[64,256], index: 2, kind: input, shape index: {}]
  %s3 = inlined_call_operand.vmem [shape: f32[1,256], index: 3, kind: input, shape index: {}]
  %s4 = inlined_call_operand.vmem [shape: f32[1,64], index: 4, kind: input, shape index: {}]
  %s5 = inlined_call_operand.<no memory space> [shape: f32[1], index: 5, kind: input, shape index: {}]
  %s6 = inlined_call_operand.vmem [shape: f32[8,1], index: 6, kind: output, shape index: {}]
  %s7 = sld [smem:[#allocation0]]
  $region38: #{lstm_model_forward.1} parent=0
    _
  %s9 = ssub.s32 1, %s7
  %s10 = scalar_select 0, %s9, %s7
  %11 = sst [smem:[#allocation2]] %s5
  $region1: #{lstm_model_forward.1} parent=0
    #allocation3 [shape = 'u8[65536]{0}', space=vmem, size = 0x10000, scoped, tag = 'input window, operand 2, single buffered']
    #allocation4 [shape = 's32[1]{0}', space=sflag, size = 0x4, scoped, tag = 'scoped memory for lstm_model_forward.1']
    %12 = vsyncpa [#allocation4], 0
    // Predicated region
    $region2: #{lstm_model_forward.1} parent=1 // pred_check
      _
    $region3: #{lstm_model_forward.1} parent=1 // pred_check_branch
      %14 = sbr.rel (0) target = $region5
    $region4: #{lstm_model_forward.1} parent=1 // pred_region
      _
    $region5: #{lstm_model_forward.1} parent=1 // pred_fallthru
      _
    // Predicated region
    $region6: #{lstm_model_forward.1} parent=1 // pred_check
      _
    $region7: #{lstm_model_forward.1} parent=1 // pred_check_branch
      %16 = sbr.rel (0) target = $region9
    $region8: #{lstm_model_forward.1} parent=1 // pred_region
      _
    $region9: #{lstm_model_forward.1} parent=1 // pred_fallthru
      _
    // Predicated region
    $region10: #{lstm_model_forward.1} parent=1 // pred_check
      _
    $region11: #{lstm_model_forward.1} parent=1 // pred_check_branch
      %18 = sbr.rel (0) target = $region13
    $region12: #{lstm_model_forward.1} parent=1 // pred_region
      %s20 = ssub.s32 2048, 2048
      %21 = vsyncadd [#allocation4], %s20
      %s22 = sshll.u32 [#allocation3], 4
      %s23 = int_to_ptr.vmem [resolvable:$true] %s22
      %28 = dma.hbm_to_vmem [thread:$0]  %s2, 2048, %s23, [#allocation4], 256, 256, 16
    $region13: #{lstm_model_forward.1} parent=1 // pred_fallthru
      _
    // Predicated region
    $region14: #{lstm_model_forward.1} parent=1 // pred_check
      _
    $region15: #{lstm_model_forward.1} parent=1 // pred_check_branch
      %30 = sbr.rel (0) target = $region17
    $region16: #{lstm_model_forward.1} parent=1 // pred_region
      _
    $region17: #{lstm_model_forward.1} parent=1 // pred_fallthru
      _
    // Predicated region
    $region18: #{lstm_model_forward.1} parent=1 // pred_check
      _
    $region19: #{lstm_model_forward.1} parent=1 // pred_check_branch
      %32 = sbr.rel (0) target = $region21
    $region20: #{lstm_model_forward.1} parent=1 // pred_region
      _
    $region21: #{lstm_model_forward.1} parent=1 // pred_fallthru
      _
    // Predicated region
    $region22: #{lstm_model_forward.1} parent=1 // pred_check
      _
    $region23: #{lstm_model_forward.1} parent=1 // pred_check_branch
      %34 = sbr.rel (0) target = $region25
    $region24: #{lstm_model_forward.1} parent=1 // pred_region
      _
    $region25: #{lstm_model_forward.1} parent=1 // pred_fallthru
      _
    // Predicated region
    $region26: #{lstm_model_forward.1} parent=1 // pred_check
      _
    $region27: #{lstm_model_forward.1} parent=1 // pred_check_branch
      %36 = sbr.rel (0) target = $region29
    $region28: #{lstm_model_forward.1} parent=1 // pred_region
      %37 = dma.done [#allocation4], 2048
    $region29: #{lstm_model_forward.1} parent=1 // pred_fallthru
      _
    %v38 = vld [vmem:[%s1] sm:$0x3]
    %v39 = vld [vmem:[%s3] sm:$0x3]
    %v40 = vld [vmem:[%s0] sm:$0xff]
    %v41 = vld [vmem:[#allocation3] sm:$0xff]
    %v42 = vld [vmem:[#allocation3 + $0x8] sm:$0xff]
    %v43 = vld [vmem:[#allocation3 + $0x10] sm:$0xff]
    %v44 = vld [vmem:[#allocation3 + $0x18] sm:$0xff]
    %v45 = vld [vmem:[#allocation3 + $0x20] sm:$0xff]
    %v46 = vld [vmem:[#allocation3 + $0x28] sm:$0xff]
    %v47 = vld [vmem:[#allocation3 + $0x30] sm:$0xff]
    %v48 = vld [vmem:[#allocation3 + $0x38] sm:$0xff]
    %v49 = vld [vmem:[#allocation3 + $0x40] sm:$0xff]
    %v50 = vld [vmem:[#allocation3 + $0x48] sm:$0xff]
    %v51 = vld [vmem:[#allocation3 + $0x50] sm:$0xff]
    %v52 = vld [vmem:[#allocation3 + $0x58] sm:$0xff]
    %v53 = vld [vmem:[#allocation3 + $0x60] sm:$0xff]
    %v54 = vld [vmem:[#allocation3 + $0x68] sm:$0xff]
    %v55 = vld [vmem:[#allocation3 + $0x70] sm:$0xff]
    %v56 = vld [vmem:[#allocation3 + $0x78] sm:$0xff]
    %58 = vset.pattern.permute.xlu0 0
    %59 = vperm.xlu0 %58, %v40
    %v60 = vpop.permute.xlu0 %59
    %v63 = vlaneseq
    %v64 = vshrl.u32 %v63, 7
    %v65 = vsub.s32 0, %v64
    %v66 = vrot.slane %v38, %v65
    %v67 = vlaneseq
    %v68 = vshrl.u32 %v67, 7
    %v69 = vsub.s32 1, %v68
    %v70 = vrot.slane %v38, %v69
    %v73 = vmul.f32 %v60, %v66
    %v74 = vmul.f32 %v60, %v70
    %vm75 = vcmask 523264
    %v77 = vsel %vm75, 0.0, 0
    %79 = vmatprep.subr.mxu0 %v42
    %80 = vmatpush1.msra.mxu0 %v41
    %81 = vmatprep.subr.mxu0 %v44
    %82 = vmatpush1.msra.mxu0 %v43
    %83 = vmatprep.subr.mxu0 %v46
    %84 = vmatpush1.msra.mxu0 %v45
    %85 = vmatprep.subr.mxu0 %v48
    %86 = vmatpush1.msra.mxu0 %v47
    %87 = vmatprep.subr.mxu0 %v50
    %88 = vmatpush1.msra.mxu0 %v49
    %89 = vmatprep.subr.mxu0 %v52
    %90 = vmatpush1.msra.mxu0 %v51
    %91 = vmatprep.subr.mxu0 %v54
    %92 = vmatpush1.msra.mxu0 %v53
    %93 = vmatprep.subr.mxu0 %v56
    %94 = vmatpush1.msra.mxu0 %v55
    %95 = vmatprep.subr.mxu0 0.0
    %96 = vmatpush1.msra.mxu0 0.0
    %97 = vmatprep.subr.mxu0 0.0
    %98 = vmatpush1.msra.mxu0 0.0
    %99 = vmatprep.subr.mxu0 0.0
    %100 = vmatpush1.msra.mxu0 0.0
    %101 = vmatprep.subr.mxu0 0.0
    %102 = vmatpush1.msra.mxu0 0.0
    %103 = vmatprep.subr.mxu0 0.0
    %104 = vmatpush1.msra.mxu0 0.0
    %105 = vmatprep.subr.mxu0 0.0
    %106 = vmatpush1.msra.mxu0 0.0
    %107 = vmatprep.subr.mxu0 0.0
    %108 = vmatpush1.msra.mxu0 0.0
    %109 = vmatprep.subr.mxu0 0.0
    %110 = vmatpush1.msra.mxu0 0.0
    %111 = vmatprep.subr.mxu0 0.0
    %112 = vmatpush1.msra.mxu0 0.0
    %113 = vmatprep.subr.mxu0 0.0
    %114 = vmatpush1.msra.mxu0 0.0
    %115 = vmatprep.subr.mxu0 0.0
    %116 = vmatpush1.msra.mxu0 0.0
    %117 = vmatprep.subr.mxu0 0.0
    %118 = vmatpush1.msra.mxu0 0.0
    %119 = vmatprep.subr.mxu0 0.0
    %120 = vmatpush1.msra.mxu0 0.0
    %121 = vmatprep.subr.mxu0 0.0
    %122 = vmatpush1.msra.mxu0 0.0
    %123 = vmatprep.subr.mxu0 0.0
    %124 = vmatpush1.msra.mxu0 0.0
    %125 = vmatprep.subr.mxu0 0.0
    %126 = vmatpush1.msra.mxu0 0.0
    %127 = vmatprep.subr.mxu0 0.0
    %128 = vmatpush1.msra.mxu0 0.0
    %129 = vmatprep.subr.mxu0 0.0
    %130 = vmatpush1.msra.mxu0 0.0
    %131 = vmatprep.subr.mxu0 0.0
    %132 = vmatpush1.msra.mxu0 0.0
    %133 = vmatprep.subr.mxu0 0.0
    %134 = vmatpush1.msra.mxu0 0.0
    %135 = vmatprep.subr.mxu0 0.0
    %136 = vmatpush1.msra.mxu0 0.0
    %137 = vmatprep.subr.mxu0 0.0
    %138 = vmatpush1.msra.mxu0 0.0
    %139 = vmatprep.subr.mxu0 0.0
    %140 = vmatpush1.msra.mxu0 0.0
    %141 = vmatprep.subr.mxu0 0.0
    %142 = vmatpush1.msra.mxu0 0.0
    %143 = vmatprep.mubr.f32.mxu0 0.0
    %144 = vmatmul.mubr.f32.gmra.mrb[0].mxu0 %v77
    %v145 = vpop.f32.mrb[0].mxu0
    %v146 = vadd.f32 %v73, %v145
    %v147 = vpop.f32.mrb[0].mxu0
    %v148 = vadd.f32 %v74, %v147
    %149 = vdwg.mxu0
    %v151 = vlaneseq
    %v152 = vshrl.u32 %v151, 7
    %v153 = vsub.s32 0, %v152
    %v154 = vrot.slane %v39, %v153
    %v155 = vlaneseq
    %v156 = vshrl.u32 %v155, 7
    %v157 = vsub.s32 1, %v156
    %v158 = vrot.slane %v39, %v157
    %v161 = vadd.f32 %v146, %v154
    %v162 = vadd.f32 %v148, %v158
    %v163 = vtanh.pop %v161
    %v164 = vtanh.pop %v162
    %v165 = vmul.f32 %v163, 0.5
    %v166 = vadd.f32 %v165, 0.5
    %v167 = vmul.f32 %v164, 0.5
    %v168 = vadd.f32 %v167, 0.5
    %v169 = vmul.f32 %v166, 0.0
    %v170 = vmul.f32 %v166, %v164
    %172 = vrot.lane.b32.xlu0 %v170, 64
    %v173 = vpop.permute.xlu0 %172
    %v175 = vadd.f32 %v169, %v173
    %v176 = vtanh.pop %v175
    %v177 = vmul.f32 %v168, %v176
    %s178 = scalar_lea.vmem %s0, 8
    %v179 = vld [vmem:[%s178] sm:$0xff]
    %181 = vset.pattern.permute.xlu0 0
    %182 = vperm.xlu0 %181, %v179
    %v183 = vpop.permute.xlu0 %182
    %v185 = vmul.f32 %v183, %v66
    %v186 = vmul.f32 %v183, %v70
    %188 = vrot.lane.b32.xlu0 %v177, 64
    %v189 = vpop.permute.xlu0 %188
    %v190 = vsel %vm75, %v189, 0
    %192 = vmatprep.subr.mxu0 %v42
    %193 = vmatpush1.msra.mxu0 %v41
    %194 = vmatprep.subr.mxu0 %v44
    %195 = vmatpush1.msra.mxu0 %v43
    %196 = vmatprep.subr.mxu0 %v46
    %197 = vmatpush1.msra.mxu0 %v45
    %198 = vmatprep.subr.mxu0 %v48
    %199 = vmatpush1.msra.mxu0 %v47
    %200 = vmatprep.subr.mxu0 %v50
    %201 = vmatpush1.msra.mxu0 %v49
    %202 = vmatprep.subr.mxu0 %v52
    %203 = vmatpush1.msra.mxu0 %v51
    %204 = vmatprep.subr.mxu0 %v54
    %205 = vmatpush1.msra.mxu0 %v53
    %206 = vmatprep.subr.mxu0 %v56
    %207 = vmatpush1.msra.mxu0 %v55
    %208 = vmatprep.subr.mxu0 0.0
    %209 = vmatpush1.msra.mxu0 0.0
    %210 = vmatprep.subr.mxu0 0.0
    %211 = vmatpush1.msra.mxu0 0.0
    %212 = vmatprep.subr.mxu0 0.0
    %213 = vmatpush1.msra.mxu0 0.0
    %214 = vmatprep.subr.mxu0 0.0
    %215 = vmatpush1.msra.mxu0 0.0
    %216 = vmatprep.subr.mxu0 0.0
    %217 = vmatpush1.msra.mxu0 0.0
    %218 = vmatprep.subr.mxu0 0.0
    %219 = vmatpush1.msra.mxu0 0.0
    %220 = vmatprep.subr.mxu0 0.0
    %221 = vmatpush1.msra.mxu0 0.0
    %222 = vmatprep.subr.mxu0 0.0
    %223 = vmatpush1.msra.mxu0 0.0
    %224 = vmatprep.subr.mxu0 0.0
    %225 = vmatpush1.msra.mxu0 0.0
    %226 = vmatprep.subr.mxu0 0.0
    %227 = vmatpush1.msra.mxu0 0.0
    %228 = vmatprep.subr.mxu0 0.0
    %229 = vmatpush1.msra.mxu0 0.0
    %230 = vmatprep.subr.mxu0 0.0
    %231 = vmatpush1.msra.mxu0 0.0
    %232 = vmatprep.subr.mxu0 0.0
    %233 = vmatpush1.msra.mxu0 0.0
    %234 = vmatprep.subr.mxu0 0.0
    %235 = vmatpush1.msra.mxu0 0.0
    %236 = vmatprep.subr.mxu0 0.0
    %237 = vmatpush1.msra.mxu0 0.0
    %238 = vmatprep.subr.mxu0 0.0
    %239 = vmatpush1.msra.mxu0 0.0
    %240 = vmatprep.subr.mxu0 0.0
    %241 = vmatpush1.msra.mxu0 0.0
    %242 = vmatprep.subr.mxu0 0.0
    %243 = vmatpush1.msra.mxu0 0.0
    %244 = vmatprep.subr.mxu0 0.0
    %245 = vmatpush1.msra.mxu0 0.0
    %246 = vmatprep.subr.mxu0 0.0
    %247 = vmatpush1.msra.mxu0 0.0
    %248 = vmatprep.subr.mxu0 0.0
    %249 = vmatpush1.msra.mxu0 0.0
    %250 = vmatprep.subr.mxu0 0.0
    %251 = vmatpush1.msra.mxu0 0.0
    %252 = vmatprep.subr.mxu0 0.0
    %253 = vmatpush1.msra.mxu0 0.0
    %254 = vmatprep.subr.mxu0 0.0
    %255 = vmatpush1.msra.mxu0 0.0
    %256 = vmatprep.mubr.f32.mxu0 0.0
    %257 = vmatmul.mubr.f32.gmra.mrb[0].mxu0 %v190
    %v258 = vpop.f32.mrb[0].mxu0
    %v259 = vadd.f32 %v185, %v258
    %v260 = vpop.f32.mrb[0].mxu0
    %v261 = vadd.f32 %v186, %v260
    %262 = vdwg.mxu0
    %v263 = vadd.f32 %v259, %v154
    %v264 = vadd.f32 %v261, %v158
    %v265 = vtanh.pop %v263
    %v266 = vtanh.pop %v264
    %v267 = vmul.f32 %v265, 0.5
    %v268 = vadd.f32 %v267, 0.5
    %v269 = vmul.f32 %v266, 0.5
    %v270 = vadd.f32 %v269, 0.5
    %v271 = vmul.f32 %v268, %v175
    %v272 = vmul.f32 %v268, %v266
    %274 = vrot.lane.b32.xlu0 %v272, 64
    %v275 = vpop.permute.xlu0 %274
    %v277 = vadd.f32 %v271, %v275
    %v278 = vtanh.pop %v277
    %v279 = vmul.f32 %v270, %v278
    %s280 = scalar_lea.vmem %s0, 16
    %v281 = vld [vmem:[%s280] sm:$0xff]
    %283 = vset.pattern.permute.xlu0 0
    %284 = vperm.xlu0 %283, %v281
    %v285 = vpop.permute.xlu0 %284
    %v287 = vmul.f32 %v285, %v66
    %v288 = vmul.f32 %v285, %v70
    %290 = vrot.lane.b32.xlu0 %v279, 64
    %v291 = vpop.permute.xlu0 %290
    %v292 = vsel %vm75, %v291, 0
    %294 = vmatprep.subr.mxu0 %v42
    %295 = vmatpush1.msra.mxu0 %v41
    %296 = vmatprep.subr.mxu0 %v44
    %297 = vmatpush1.msra.mxu0 %v43
    %298 = vmatprep.subr.mxu0 %v46
    %299 = vmatpush1.msra.mxu0 %v45
    %300 = vmatprep.subr.mxu0 %v48
    %301 = vmatpush1.msra.mxu0 %v47
    %302 = vmatprep.subr.mxu0 %v50
    %303 = vmatpush1.msra.mxu0 %v49
    %304 = vmatprep.subr.mxu0 %v52
    %305 = vmatpush1.msra.mxu0 %v51
    %306 = vmatprep.subr.mxu0 %v54
    %307 = vmatpush1.msra.mxu0 %v53
    %308 = vmatprep.subr.mxu0 %v56
    %309 = vmatpush1.msra.mxu0 %v55
    %310 = vmatprep.subr.mxu0 0.0
    %311 = vmatpush1.msra.mxu0 0.0
    %312 = vmatprep.subr.mxu0 0.0
    %313 = vmatpush1.msra.mxu0 0.0
    %314 = vmatprep.subr.mxu0 0.0
    %315 = vmatpush1.msra.mxu0 0.0
    %316 = vmatprep.subr.mxu0 0.0
    %317 = vmatpush1.msra.mxu0 0.0
    %318 = vmatprep.subr.mxu0 0.0
    %319 = vmatpush1.msra.mxu0 0.0
    %320 = vmatprep.subr.mxu0 0.0
    %321 = vmatpush1.msra.mxu0 0.0
    %322 = vmatprep.subr.mxu0 0.0
    %323 = vmatpush1.msra.mxu0 0.0
    %324 = vmatprep.subr.mxu0 0.0
    %325 = vmatpush1.msra.mxu0 0.0
    %326 = vmatprep.subr.mxu0 0.0
    %327 = vmatpush1.msra.mxu0 0.0
    %328 = vmatprep.subr.mxu0 0.0
    %329 = vmatpush1.msra.mxu0 0.0
    %330 = vmatprep.subr.mxu0 0.0
    %331 = vmatpush1.msra.mxu0 0.0
    %332 = vmatprep.subr.mxu0 0.0
    %333 = vmatpush1.msra.mxu0 0.0
    %334 = vmatprep.subr.mxu0 0.0
    %335 = vmatpush1.msra.mxu0 0.0
    %336 = vmatprep.subr.mxu0 0.0
    %337 = vmatpush1.msra.mxu0 0.0
    %338 = vmatprep.subr.mxu0 0.0
    %339 = vmatpush1.msra.mxu0 0.0
    %340 = vmatprep.subr.mxu0 0.0
    %341 = vmatpush1.msra.mxu0 0.0
    %342 = vmatprep.subr.mxu0 0.0
    %343 = vmatpush1.msra.mxu0 0.0
    %344 = vmatprep.subr.mxu0 0.0
    %345 = vmatpush1.msra.mxu0 0.0
    %346 = vmatprep.subr.mxu0 0.0
    %347 = vmatpush1.msra.mxu0 0.0
    %348 = vmatprep.subr.mxu0 0.0
    %349 = vmatpush1.msra.mxu0 0.0
    %350 = vmatprep.subr.mxu0 0.0
    %351 = vmatpush1.msra.mxu0 0.0
    %352 = vmatprep.subr.mxu0 0.0
    %353 = vmatpush1.msra.mxu0 0.0
    %354 = vmatprep.subr.mxu0 0.0
    %355 = vmatpush1.msra.mxu0 0.0
    %356 = vmatprep.subr.mxu0 0.0
    %357 = vmatpush1.msra.mxu0 0.0
    %358 = vmatprep.mubr.f32.mxu0 0.0
    %359 = vmatmul.mubr.f32.gmra.mrb[0].mxu0 %v292
    %v360 = vpop.f32.mrb[0].mxu0
    %v361 = vadd.f32 %v287, %v360
    %v362 = vpop.f32.mrb[0].mxu0
    %v363 = vadd.f32 %v288, %v362
    %364 = vdwg.mxu0
    %v365 = vadd.f32 %v361, %v154
    %v366 = vadd.f32 %v363, %v158
    %v367 = vtanh.pop %v365
    %v368 = vtanh.pop %v366
    %v369 = vmul.f32 %v367, 0.5
    %v370 = vadd.f32 %v369, 0.5
    %v371 = vmul.f32 %v368, 0.5
    %v372 = vadd.f32 %v371, 0.5
    %v373 = vmul.f32 %v370, %v277
    %v374 = vmul.f32 %v370, %v368
    %376 = vrot.lane.b32.xlu0 %v374, 64
    %v377 = vpop.permute.xlu0 %376
    %v379 = vadd.f32 %v373, %v377
    %v380 = vtanh.pop %v379
    %v381 = vmul.f32 %v372, %v380
    %s382 = scalar_lea.vmem %s0, 24
    %v383 = vld [vmem:[%s382] sm:$0xff]
    %385 = vset.pattern.permute.xlu0 0
    %386 = vperm.xlu0 %385, %v383
    %v387 = vpop.permute.xlu0 %386
    %v389 = vmul.f32 %v387, %v66
    %v390 = vmul.f32 %v387, %v70
    %392 = vrot.lane.b32.xlu0 %v381, 64
    %v393 = vpop.permute.xlu0 %392
    %v394 = vsel %vm75, %v393, 0
    %396 = vmatprep.subr.mxu0 %v42
    %397 = vmatpush1.msra.mxu0 %v41
    %398 = vmatprep.subr.mxu0 %v44
    %399 = vmatpush1.msra.mxu0 %v43
    %400 = vmatprep.subr.mxu0 %v46
    %401 = vmatpush1.msra.mxu0 %v45
    %402 = vmatprep.subr.mxu0 %v48
    %403 = vmatpush1.msra.mxu0 %v47
    %404 = vmatprep.subr.mxu0 %v50
    %405 = vmatpush1.msra.mxu0 %v49
    %406 = vmatprep.subr.mxu0 %v52
    %407 = vmatpush1.msra.mxu0 %v51
    %408 = vmatprep.subr.mxu0 %v54
    %409 = vmatpush1.msra.mxu0 %v53
    %410 = vmatprep.subr.mxu0 %v56
    %411 = vmatpush1.msra.mxu0 %v55
    %412 = vmatprep.subr.mxu0 0.0
    %413 = vmatpush1.msra.mxu0 0.0
    %414 = vmatprep.subr.mxu0 0.0
    %415 = vmatpush1.msra.mxu0 0.0
    %416 = vmatprep.subr.mxu0 0.0
    %417 = vmatpush1.msra.mxu0 0.0
    %418 = vmatprep.subr.mxu0 0.0
    %419 = vmatpush1.msra.mxu0 0.0
    %420 = vmatprep.subr.mxu0 0.0
    %421 = vmatpush1.msra.mxu0 0.0
    %422 = vmatprep.subr.mxu0 0.0
    %423 = vmatpush1.msra.mxu0 0.0
    %424 = vmatprep.subr.mxu0 0.0
    %425 = vmatpush1.msra.mxu0 0.0
    %426 = vmatprep.subr.mxu0 0.0
    %427 = vmatpush1.msra.mxu0 0.0
    %428 = vmatprep.subr.mxu0 0.0
    %429 = vmatpush1.msra.mxu0 0.0
    %430 = vmatprep.subr.mxu0 0.0
    %431 = vmatpush1.msra.mxu0 0.0
    %432 = vmatprep.subr.mxu0 0.0
    %433 = vmatpush1.msra.mxu0 0.0
    %434 = vmatprep.subr.mxu0 0.0
    %435 = vmatpush1.msra.mxu0 0.0
    %436 = vmatprep.subr.mxu0 0.0
    %437 = vmatpush1.msra.mxu0 0.0
    %438 = vmatprep.subr.mxu0 0.0
    %439 = vmatpush1.msra.mxu0 0.0
    %440 = vmatprep.subr.mxu0 0.0
    %441 = vmatpush1.msra.mxu0 0.0
    %442 = vmatprep.subr.mxu0 0.0
    %443 = vmatpush1.msra.mxu0 0.0
    %444 = vmatprep.subr.mxu0 0.0
    %445 = vmatpush1.msra.mxu0 0.0
    %446 = vmatprep.subr.mxu0 0.0
    %447 = vmatpush1.msra.mxu0 0.0
    %448 = vmatprep.subr.mxu0 0.0
    %449 = vmatpush1.msra.mxu0 0.0
    %450 = vmatprep.subr.mxu0 0.0
    %451 = vmatpush1.msra.mxu0 0.0
    %452 = vmatprep.subr.mxu0 0.0
    %453 = vmatpush1.msra.mxu0 0.0
    %454 = vmatprep.subr.mxu0 0.0
    %455 = vmatpush1.msra.mxu0 0.0
    %456 = vmatprep.subr.mxu0 0.0
    %457 = vmatpush1.msra.mxu0 0.0
    %458 = vmatprep.subr.mxu0 0.0
    %459 = vmatpush1.msra.mxu0 0.0
    %460 = vmatprep.mubr.f32.mxu0 0.0
    %461 = vmatmul.mubr.f32.gmra.mrb[0].mxu0 %v394
    %v462 = vpop.f32.mrb[0].mxu0
    %v463 = vadd.f32 %v389, %v462
    %v464 = vpop.f32.mrb[0].mxu0
    %v465 = vadd.f32 %v390, %v464
    %466 = vdwg.mxu0
    %v467 = vadd.f32 %v463, %v154
    %v468 = vadd.f32 %v465, %v158
    %v469 = vtanh.pop %v467
    %v470 = vtanh.pop %v468
    %v471 = vmul.f32 %v469, 0.5
    %v472 = vadd.f32 %v471, 0.5
    %v473 = vmul.f32 %v470, 0.5
    %v474 = vadd.f32 %v473, 0.5
    %v475 = vmul.f32 %v472, %v379
    %v476 = vmul.f32 %v472, %v470
    %478 = vrot.lane.b32.xlu0 %v476, 64
    %v479 = vpop.permute.xlu0 %478
    %v481 = vadd.f32 %v475, %v479
    %v482 = vtanh.pop %v481
    %v483 = vmul.f32 %v474, %v482
    %s484 = scalar_lea.vmem %s0, 32
    %v485 = vld [vmem:[%s484] sm:$0xff]
    %487 = vset.pattern.permute.xlu0 0
    %488 = vperm.xlu0 %487, %v485
    %v489 = vpop.permute.xlu0 %488
    %v491 = vmul.f32 %v489, %v66
    %v492 = vmul.f32 %v489, %v70
    %494 = vrot.lane.b32.xlu0 %v483, 64
    %v495 = vpop.permute.xlu0 %494
    %v496 = vsel %vm75, %v495, 0
    %498 = vmatprep.subr.mxu0 %v42
    %499 = vmatpush1.msra.mxu0 %v41
    %500 = vmatprep.subr.mxu0 %v44
    %501 = vmatpush1.msra.mxu0 %v43
    %502 = vmatprep.subr.mxu0 %v46
    %503 = vmatpush1.msra.mxu0 %v45
    %504 = vmatprep.subr.mxu0 %v48
    %505 = vmatpush1.msra.mxu0 %v47
    %506 = vmatprep.subr.mxu0 %v50
    %507 = vmatpush1.msra.mxu0 %v49
    %508 = vmatprep.subr.mxu0 %v52
    %509 = vmatpush1.msra.mxu0 %v51
    %510 = vmatprep.subr.mxu0 %v54
    %511 = vmatpush1.msra.mxu0 %v53
    %512 = vmatprep.subr.mxu0 %v56
    %513 = vmatpush1.msra.mxu0 %v55
    %514 = vmatprep.subr.mxu0 0.0
    %515 = vmatpush1.msra.mxu0 0.0
    %516 = vmatprep.subr.mxu0 0.0
    %517 = vmatpush1.msra.mxu0 0.0
    %518 = vmatprep.subr.mxu0 0.0
    %519 = vmatpush1.msra.mxu0 0.0
    %520 = vmatprep.subr.mxu0 0.0
    %521 = vmatpush1.msra.mxu0 0.0
    %522 = vmatprep.subr.mxu0 0.0
    %523 = vmatpush1.msra.mxu0 0.0
    %524 = vmatprep.subr.mxu0 0.0
    %525 = vmatpush1.msra.mxu0 0.0
    %526 = vmatprep.subr.mxu0 0.0
    %527 = vmatpush1.msra.mxu0 0.0
    %528 = vmatprep.subr.mxu0 0.0
    %529 = vmatpush1.msra.mxu0 0.0
    %530 = vmatprep.subr.mxu0 0.0
    %531 = vmatpush1.msra.mxu0 0.0
    %532 = vmatprep.subr.mxu0 0.0
    %533 = vmatpush1.msra.mxu0 0.0
    %534 = vmatprep.subr.mxu0 0.0
    %535 = vmatpush1.msra.mxu0 0.0
    %536 = vmatprep.subr.mxu0 0.0
    %537 = vmatpush1.msra.mxu0 0.0
    %538 = vmatprep.subr.mxu0 0.0
    %539 = vmatpush1.msra.mxu0 0.0
    %540 = vmatprep.subr.mxu0 0.0
    %541 = vmatpush1.msra.mxu0 0.0
    %542 = vmatprep.subr.mxu0 0.0
    %543 = vmatpush1.msra.mxu0 0.0
    %544 = vmatprep.subr.mxu0 0.0
    %545 = vmatpush1.msra.mxu0 0.0
    %546 = vmatprep.subr.mxu0 0.0
    %547 = vmatpush1.msra.mxu0 0.0
    %548 = vmatprep.subr.mxu0 0.0
    %549 = vmatpush1.msra.mxu0 0.0
    %550 = vmatprep.subr.mxu0 0.0
    %551 = vmatpush1.msra.mxu0 0.0
    %552 = vmatprep.subr.mxu0 0.0
    %553 = vmatpush1.msra.mxu0 0.0
    %554 = vmatprep.subr.mxu0 0.0
    %555 = vmatpush1.msra.mxu0 0.0
    %556 = vmatprep.subr.mxu0 0.0
    %557 = vmatpush1.msra.mxu0 0.0
    %558 = vmatprep.subr.mxu0 0.0
    %559 = vmatpush1.msra.mxu0 0.0
    %560 = vmatprep.subr.mxu0 0.0
    %561 = vmatpush1.msra.mxu0 0.0
    %562 = vmatprep.mubr.f32.mxu0 0.0
    %563 = vmatmul.mubr.f32.gmra.mrb[0].mxu0 %v496
    %v564 = vpop.f32.mrb[0].mxu0
    %v565 = vadd.f32 %v491, %v564
    %v566 = vpop.f32.mrb[0].mxu0
    %v567 = vadd.f32 %v492, %v566
    %568 = vdwg.mxu0
    %v569 = vadd.f32 %v565, %v154
    %v570 = vadd.f32 %v567, %v158
    %v571 = vtanh.pop %v569
    %v572 = vtanh.pop %v570
    %v573 = vmul.f32 %v571, 0.5
    %v574 = vadd.f32 %v573, 0.5
    %v575 = vmul.f32 %v572, 0.5
    %v576 = vadd.f32 %v575, 0.5
    %v577 = vmul.f32 %v574, %v481
    %v578 = vmul.f32 %v574, %v572
    %580 = vrot.lane.b32.xlu0 %v578, 64
    %v581 = vpop.permute.xlu0 %580
    %v583 = vadd.f32 %v577, %v581
    %v584 = vtanh.pop %v583
    %v585 = vmul.f32 %v576, %v584
    %s586 = scalar_lea.vmem %s0, 40
    %v587 = vld [vmem:[%s586] sm:$0xff]
    %589 = vset.pattern.permute.xlu0 0
    %590 = vperm.xlu0 %589, %v587
    %v591 = vpop.permute.xlu0 %590
    %v593 = vmul.f32 %v591, %v66
    %v594 = vmul.f32 %v591, %v70
    %596 = vrot.lane.b32.xlu0 %v585, 64
    %v597 = vpop.permute.xlu0 %596
    %v598 = vsel %vm75, %v597, 0
    %600 = vmatprep.subr.mxu0 %v42
    %601 = vmatpush1.msra.mxu0 %v41
    %602 = vmatprep.subr.mxu0 %v44
    %603 = vmatpush1.msra.mxu0 %v43
    %604 = vmatprep.subr.mxu0 %v46
    %605 = vmatpush1.msra.mxu0 %v45
    %606 = vmatprep.subr.mxu0 %v48
    %607 = vmatpush1.msra.mxu0 %v47
    %608 = vmatprep.subr.mxu0 %v50
    %609 = vmatpush1.msra.mxu0 %v49
    %610 = vmatprep.subr.mxu0 %v52
    %611 = vmatpush1.msra.mxu0 %v51
    %612 = vmatprep.subr.mxu0 %v54
    %613 = vmatpush1.msra.mxu0 %v53
    %614 = vmatprep.subr.mxu0 %v56
    %615 = vmatpush1.msra.mxu0 %v55
    %616 = vmatprep.subr.mxu0 0.0
    %617 = vmatpush1.msra.mxu0 0.0
    %618 = vmatprep.subr.mxu0 0.0
    %619 = vmatpush1.msra.mxu0 0.0
    %620 = vmatprep.subr.mxu0 0.0
    %621 = vmatpush1.msra.mxu0 0.0
    %622 = vmatprep.subr.mxu0 0.0
    %623 = vmatpush1.msra.mxu0 0.0
    %624 = vmatprep.subr.mxu0 0.0
    %625 = vmatpush1.msra.mxu0 0.0
    %626 = vmatprep.subr.mxu0 0.0
    %627 = vmatpush1.msra.mxu0 0.0
    %628 = vmatprep.subr.mxu0 0.0
    %629 = vmatpush1.msra.mxu0 0.0
    %630 = vmatprep.subr.mxu0 0.0
    %631 = vmatpush1.msra.mxu0 0.0
    %632 = vmatprep.subr.mxu0 0.0
    %633 = vmatpush1.msra.mxu0 0.0
    %634 = vmatprep.subr.mxu0 0.0
    %635 = vmatpush1.msra.mxu0 0.0
    %636 = vmatprep.subr.mxu0 0.0
    %637 = vmatpush1.msra.mxu0 0.0
    %638 = vmatprep.subr.mxu0 0.0
    %639 = vmatpush1.msra.mxu0 0.0
    %640 = vmatprep.subr.mxu0 0.0
    %641 = vmatpush1.msra.mxu0 0.0
    %642 = vmatprep.subr.mxu0 0.0
    %643 = vmatpush1.msra.mxu0 0.0
    %644 = vmatprep.subr.mxu0 0.0
    %645 = vmatpush1.msra.mxu0 0.0
    %646 = vmatprep.subr.mxu0 0.0
    %647 = vmatpush1.msra.mxu0 0.0
    %648 = vmatprep.subr.mxu0 0.0
    %649 = vmatpush1.msra.mxu0 0.0
    %650 = vmatprep.subr.mxu0 0.0
    %651 = vmatpush1.msra.mxu0 0.0
    %652 = vmatprep.subr.mxu0 0.0
    %653 = vmatpush1.msra.mxu0 0.0
    %654 = vmatprep.subr.mxu0 0.0
    %655 = vmatpush1.msra.mxu0 0.0
    %656 = vmatprep.subr.mxu0 0.0
    %657 = vmatpush1.msra.mxu0 0.0
    %658 = vmatprep.subr.mxu0 0.0
    %659 = vmatpush1.msra.mxu0 0.0
    %660 = vmatprep.subr.mxu0 0.0
    %661 = vmatpush1.msra.mxu0 0.0
    %662 = vmatprep.subr.mxu0 0.0
    %663 = vmatpush1.msra.mxu0 0.0
    %664 = vmatprep.mubr.f32.mxu0 0.0
    %665 = vmatmul.mubr.f32.gmra.mrb[0].mxu0 %v598
    %v666 = vpop.f32.mrb[0].mxu0
    %v667 = vadd.f32 %v593, %v666
    %v668 = vpop.f32.mrb[0].mxu0
    %v669 = vadd.f32 %v594, %v668
    %670 = vdwg.mxu0
    %v671 = vadd.f32 %v667, %v154
    %v672 = vadd.f32 %v669, %v158
    %v673 = vtanh.pop %v671
    %v674 = vtanh.pop %v672
    %v675 = vmul.f32 %v673, 0.5
    %v676 = vadd.f32 %v675, 0.5
    %v677 = vmul.f32 %v674, 0.5
    %v678 = vadd.f32 %v677, 0.5
    %v679 = vmul.f32 %v676, %v583
    %v680 = vmul.f32 %v676, %v674
    %682 = vrot.lane.b32.xlu0 %v680, 64
    %v683 = vpop.permute.xlu0 %682
    %v685 = vadd.f32 %v679, %v683
    %v686 = vtanh.pop %v685
    %v687 = vmul.f32 %v678, %v686
    %s688 = scalar_lea.vmem %s0, 48
    %v689 = vld [vmem:[%s688] sm:$0xff]
    %691 = vset.pattern.permute.xlu0 0
    %692 = vperm.xlu0 %691, %v689
    %v693 = vpop.permute.xlu0 %692
    %v695 = vmul.f32 %v693, %v66
    %v696 = vmul.f32 %v693, %v70
    %698 = vrot.lane.b32.xlu0 %v687, 64
    %v699 = vpop.permute.xlu0 %698
    %v700 = vsel %vm75, %v699, 0
    %702 = vmatprep.subr.mxu0 %v42
    %703 = vmatpush1.msra.mxu0 %v41
    %704 = vmatprep.subr.mxu0 %v44
    %705 = vmatpush1.msra.mxu0 %v43
    %706 = vmatprep.subr.mxu0 %v46
    %707 = vmatpush1.msra.mxu0 %v45
    %708 = vmatprep.subr.mxu0 %v48
    %709 = vmatpush1.msra.mxu0 %v47
    %710 = vmatprep.subr.mxu0 %v50
    %711 = vmatpush1.msra.mxu0 %v49
    %712 = vmatprep.subr.mxu0 %v52
    %713 = vmatpush1.msra.mxu0 %v51
    %714 = vmatprep.subr.mxu0 %v54
    %715 = vmatpush1.msra.mxu0 %v53
    %716 = vmatprep.subr.mxu0 %v56
    %717 = vmatpush1.msra.mxu0 %v55
    %718 = vmatprep.subr.mxu0 0.0
    %719 = vmatpush1.msra.mxu0 0.0
    %720 = vmatprep.subr.mxu0 0.0
    %721 = vmatpush1.msra.mxu0 0.0
    %722 = vmatprep.subr.mxu0 0.0
    %723 = vmatpush1.msra.mxu0 0.0
    %724 = vmatprep.subr.mxu0 0.0
    %725 = vmatpush1.msra.mxu0 0.0
    %726 = vmatprep.subr.mxu0 0.0
    %727 = vmatpush1.msra.mxu0 0.0
    %728 = vmatprep.subr.mxu0 0.0
    %729 = vmatpush1.msra.mxu0 0.0
    %730 = vmatprep.subr.mxu0 0.0
    %731 = vmatpush1.msra.mxu0 0.0
    %732 = vmatprep.subr.mxu0 0.0
    %733 = vmatpush1.msra.mxu0 0.0
    %734 = vmatprep.subr.mxu0 0.0
    %735 = vmatpush1.msra.mxu0 0.0
    %736 = vmatprep.subr.mxu0 0.0
    %737 = vmatpush1.msra.mxu0 0.0
    %738 = vmatprep.subr.mxu0 0.0
    %739 = vmatpush1.msra.mxu0 0.0
    %740 = vmatprep.subr.mxu0 0.0
    %741 = vmatpush1.msra.mxu0 0.0
    %742 = vmatprep.subr.mxu0 0.0
    %743 = vmatpush1.msra.mxu0 0.0
    %744 = vmatprep.subr.mxu0 0.0
    %745 = vmatpush1.msra.mxu0 0.0
    %746 = vmatprep.subr.mxu0 0.0
    %747 = vmatpush1.msra.mxu0 0.0
    %748 = vmatprep.subr.mxu0 0.0
    %749 = vmatpush1.msra.mxu0 0.0
    %750 = vmatprep.subr.mxu0 0.0
    %751 = vmatpush1.msra.mxu0 0.0
    %752 = vmatprep.subr.mxu0 0.0
    %753 = vmatpush1.msra.mxu0 0.0
    %754 = vmatprep.subr.mxu0 0.0
    %755 = vmatpush1.msra.mxu0 0.0
    %756 = vmatprep.subr.mxu0 0.0
    %757 = vmatpush1.msra.mxu0 0.0
    %758 = vmatprep.subr.mxu0 0.0
    %759 = vmatpush1.msra.mxu0 0.0
    %760 = vmatprep.subr.mxu0 0.0
    %761 = vmatpush1.msra.mxu0 0.0
    %762 = vmatprep.subr.mxu0 0.0
    %763 = vmatpush1.msra.mxu0 0.0
    %764 = vmatprep.subr.mxu0 0.0
    %765 = vmatpush1.msra.mxu0 0.0
    %766 = vmatprep.mubr.f32.mxu0 0.0
    %767 = vmatmul.mubr.f32.gmra.mrb[0].mxu0 %v700
    %v768 = vpop.f32.mrb[0].mxu0
    %v769 = vadd.f32 %v695, %v768
    %v770 = vpop.f32.mrb[0].mxu0
    %v771 = vadd.f32 %v696, %v770
    %772 = vdwg.mxu0
    %v773 = vadd.f32 %v769, %v154
    %v774 = vadd.f32 %v771, %v158
    %v775 = vtanh.pop %v773
    %v776 = vtanh.pop %v774
    %v777 = vmul.f32 %v775, 0.5
    %v778 = vadd.f32 %v777, 0.5
    %v779 = vmul.f32 %v776, 0.5
    %v780 = vadd.f32 %v779, 0.5
    %v781 = vmul.f32 %v778, %v685
    %v782 = vmul.f32 %v778, %v776
    %784 = vrot.lane.b32.xlu0 %v782, 64
    %v785 = vpop.permute.xlu0 %784
    %v787 = vadd.f32 %v781, %v785
    %v788 = vtanh.pop %v787
    %v789 = vmul.f32 %v780, %v788
    %s790 = scalar_lea.vmem %s0, 56
    %v791 = vld [vmem:[%s790] sm:$0xff]
    %793 = vset.pattern.permute.xlu0 0
    %794 = vperm.xlu0 %793, %v791
    %v795 = vpop.permute.xlu0 %794
    %v797 = vmul.f32 %v795, %v66
    %v798 = vmul.f32 %v795, %v70
    %800 = vrot.lane.b32.xlu0 %v789, 64
    %v801 = vpop.permute.xlu0 %800
    %v802 = vsel %vm75, %v801, 0
    %804 = vmatprep.subr.mxu0 %v42
    %805 = vmatpush1.msra.mxu0 %v41
    %806 = vmatprep.subr.mxu0 %v44
    %807 = vmatpush1.msra.mxu0 %v43
    %808 = vmatprep.subr.mxu0 %v46
    %809 = vmatpush1.msra.mxu0 %v45
    %810 = vmatprep.subr.mxu0 %v48
    %811 = vmatpush1.msra.mxu0 %v47
    %812 = vmatprep.subr.mxu0 %v50
    %813 = vmatpush1.msra.mxu0 %v49
    %814 = vmatprep.subr.mxu0 %v52
    %815 = vmatpush1.msra.mxu0 %v51
    %816 = vmatprep.subr.mxu0 %v54
    %817 = vmatpush1.msra.mxu0 %v53
    %818 = vmatprep.subr.mxu0 %v56
    %819 = vmatpush1.msra.mxu0 %v55
    %820 = vmatprep.subr.mxu0 0.0
    %821 = vmatpush1.msra.mxu0 0.0
    %822 = vmatprep.subr.mxu0 0.0
    %823 = vmatpush1.msra.mxu0 0.0
    %824 = vmatprep.subr.mxu0 0.0
    %825 = vmatpush1.msra.mxu0 0.0
    %826 = vmatprep.subr.mxu0 0.0
    %827 = vmatpush1.msra.mxu0 0.0
    %828 = vmatprep.subr.mxu0 0.0
    %829 = vmatpush1.msra.mxu0 0.0
    %830 = vmatprep.subr.mxu0 0.0
    %831 = vmatpush1.msra.mxu0 0.0
    %832 = vmatprep.subr.mxu0 0.0
    %833 = vmatpush1.msra.mxu0 0.0
    %834 = vmatprep.subr.mxu0 0.0
    %835 = vmatpush1.msra.mxu0 0.0
    %836 = vmatprep.subr.mxu0 0.0
    %837 = vmatpush1.msra.mxu0 0.0
    %838 = vmatprep.subr.mxu0 0.0
    %839 = vmatpush1.msra.mxu0 0.0
    %840 = vmatprep.subr.mxu0 0.0
    %841 = vmatpush1.msra.mxu0 0.0
    %842 = vmatprep.subr.mxu0 0.0
    %843 = vmatpush1.msra.mxu0 0.0
    %844 = vmatprep.subr.mxu0 0.0
    %845 = vmatpush1.msra.mxu0 0.0
    %846 = vmatprep.subr.mxu0 0.0
    %847 = vmatpush1.msra.mxu0 0.0
    %848 = vmatprep.subr.mxu0 0.0
    %849 = vmatpush1.msra.mxu0 0.0
    %850 = vmatprep.subr.mxu0 0.0
    %851 = vmatpush1.msra.mxu0 0.0
    %852 = vmatprep.subr.mxu0 0.0
    %853 = vmatpush1.msra.mxu0 0.0
    %854 = vmatprep.subr.mxu0 0.0
    %855 = vmatpush1.msra.mxu0 0.0
    %856 = vmatprep.subr.mxu0 0.0
    %857 = vmatpush1.msra.mxu0 0.0
    %858 = vmatprep.subr.mxu0 0.0
    %859 = vmatpush1.msra.mxu0 0.0
    %860 = vmatprep.subr.mxu0 0.0
    %861 = vmatpush1.msra.mxu0 0.0
    %862 = vmatprep.subr.mxu0 0.0
    %863 = vmatpush1.msra.mxu0 0.0
    %864 = vmatprep.subr.mxu0 0.0
    %865 = vmatpush1.msra.mxu0 0.0
    %866 = vmatprep.subr.mxu0 0.0
    %867 = vmatpush1.msra.mxu0 0.0
    %868 = vmatprep.mubr.f32.mxu0 0.0
    %869 = vmatmul.mubr.f32.gmra.mrb[0].mxu0 %v802
    %v870 = vpop.f32.mrb[0].mxu0
    %v871 = vadd.f32 %v797, %v870
    %v872 = vpop.f32.mrb[0].mxu0
    %v873 = vadd.f32 %v798, %v872
    %874 = vdwg.mxu0
    %v875 = vadd.f32 %v871, %v154
    %v876 = vadd.f32 %v873, %v158
    %v877 = vtanh.pop %v875
    %v878 = vtanh.pop %v876
    %v879 = vmul.f32 %v877, 0.5
    %v880 = vadd.f32 %v879, 0.5
    %v881 = vmul.f32 %v880, %v787
    %v882 = vmul.f32 %v880, %v878
    %884 = vrot.lane.b32.xlu0 %v882, 64
    %v885 = vpop.permute.xlu0 %884
    %v887 = vadd.f32 %v881, %v885
    %v888 = vld [vmem:[%s4] sm:$0x1]
    %v890 = vlaneseq
    %v891 = vshrl.u32 %v890, 7
    %v892 = vsub.s32 0, %v891
    %v893 = vrot.slane %v888, %v892
    %894 = vrot.lane.b32.xlu0 %v893, 64
    %v895 = vpop.permute.xlu0 %894
    %v897 = vmul.f32 %v887, %v895
    %899 = vrot.lane.b32.xlu0 %v897, 64
    %v900 = vpop.permute.xlu0 %899
    %v902 = vsel %vm75, %v900, 0.0
    %903 = vadd.xlane.f32.xlu0 %v902
    %v904 = vpop.xlane.xlu0 %903
    %s905 = sld [smem:[#allocation2]]
    %v906 = vstv %s905
    %v907 = vadd.f32 %v904, %v906
    %vm908 = vcmask 7168
    %909 = vst.msk [vmem:[%s6] sm:$0xff] %vm908, %v907
    // Predicated region
    $region30: #{lstm_model_forward.1} parent=1 // pred_check
      _
    $region31: #{lstm_model_forward.1} parent=1 // pred_check_branch
      %911 = sbr.rel (0) target = $region33
    $region32: #{lstm_model_forward.1} parent=1 // pred_region
      _
    $region33: #{lstm_model_forward.1} parent=1 // pred_fallthru
      _
    // Predicated region
    $region34: #{lstm_model_forward.1} parent=1 // pred_check
      _
    $region35: #{lstm_model_forward.1} parent=1 // pred_check_branch
      %913 = sbr.rel (0) target = $region37
    $region36: #{lstm_model_forward.1} parent=1 // pred_region
      _
    $region37: #{lstm_model_forward.1} parent=1 // pred_fallthru
      _
    %914 = vsyncpa [#allocation4], 1

</llo_original>
